<compile_context>
chip_gen: v7x
topology: tpu7x:2x2x1
jax: 0.10.0
libtpu: 0.0.40
codegen_flags: <defaults>
</compile_context>

<pallas_src>
import functools

import jax
import jax.numpy as jnp
from jax.experimental import pallas as pl
from jax.experimental.pallas import tpu as pltpu


def _ac_kernel(x_ref, w1_ref, b1_ref, w2_ref, b2_ref, wh_ref, bh_ref,
               out_ref, *, action_dim):
    cdt = w1_ref.dtype  # matmul-input dtype (bf16 in production, f32 for parity)
    x = x_ref[...].astype(cdt)

    # fc1 + relu (f32 accumulation / bias / relu)
    h1 = jnp.dot(x, w1_ref[...], preferred_element_type=jnp.float32) + b1_ref[...]
    h1 = jnp.maximum(h1, 0.0)

    # fc2 + relu
    h2 = jnp.dot(h1.astype(cdt), w2_ref[...],
                 preferred_element_type=jnp.float32) + b2_ref[...]
    h2 = jnp.maximum(h2, 0.0)

    # fused heads: one (TB, H) @ (H, P) matmul; lanes [0, A) = actor logits,
    # lanes [A, A+C) = critic value, remaining padded lanes are zero.
    head = jnp.dot(h2.astype(cdt), wh_ref[...],
                   preferred_element_type=jnp.float32) + bh_ref[...]

    # log_softmax over the logical actor lanes only (padded lanes -> -inf).
    lane = jax.lax.broadcasted_iota(jnp.int32, head.shape, dimension=1)
    actor_mask = lane < action_dim
    logits = jnp.where(actor_mask, head, -jnp.inf)
    m = jnp.max(logits, axis=-1, keepdims=True)
    shifted = logits - m
    lse = jnp.log(jnp.sum(jnp.exp(shifted), axis=-1, keepdims=True))
    logprob = shifted - lse

    # Single lane-dense, unmasked store: log-probs on actor lanes, raw head
    # (critic value / zero padding) elsewhere.
    out_ref[...] = jnp.where(actor_mask, logprob, head).astype(out_ref.dtype)


def pack_params(params, *, compute_dtype=jnp.bfloat16):
    """One-time packing: fuse actor/critic heads into a 128-lane slab and cast
    the matmul weights to the compute dtype.  Do this once at init, not per step."""
    w1, w2 = params["w1"], params["w2"]
    wa, wc = params["wa"], params["wc"]
    H = w1.shape[1]
    A = wa.shape[1]
    C = wc.shape[1]
    P = 128 * pl.cdiv(A + C, 128)

    wh = jnp.zeros((H, P), jnp.float32)
    wh = wh.at[:, :A].set(wa).at[:, A:A + C].set(wc)
    bh = jnp.zeros((1, P), jnp.float32)
    bh = bh.at[:, :A].set(params["ba"]).at[:, A:A + C].set(params["bc"])

    return {
        "w1": w1.astype(compute_dtype),
        "b1": params["b1"].astype(jnp.float32),
        "w2": w2.astype(compute_dtype),
        "b2": params["b2"].astype(jnp.float32),
        "wh": wh.astype(compute_dtype),
        "bh": bh,                       # biases stay f32 (f32 accumulation)
        "action_dim": int(A),
        "critic_dim": int(C),
    }


def _pick_batch_tile(B):
    """Generation-aware default batch tile (multiple of 8 sublanes)."""
    try:
        kind = jax.devices()[0].device_kind.lower()
    except Exception:  # pragma: no cover - CPU interpret etc.
        kind = ""
    v5e = ("v5 lite" in kind) or ("v5e" in kind) or ("v5lite" in kind)
    # 128 rows fill v5e's 4x128^2 MXU; v6e/v7x have a 256-row MXU.
    tb = 256 if (not v5e and B >= 512) else 128
    if B < tb:
        tb = 8 * pl.cdiv(B, 8)
    # Keep >= 2 grid steps when possible so v7x's two TensorCores both get work
    # via the "parallel" axis (also improves DMA/compute overlap elsewhere).
    if B > 8 and pl.cdiv(B, tb) < 2:
        tb = 8 * pl.cdiv(pl.cdiv(B, 2), 8)
    return max(8, tb)


def actor_critic_forward(state, packed, *, batch_tile=None, out_dtype=jnp.float32):
    """state: (B, state_dim) f32.  packed: output of pack_params().

    Returns (act_logprobs (B, A), value (B, C)) in `out_dtype`.
    """
    B, S = state.shape
    w1, b1 = packed["w1"], packed["b1"]
    w2, b2 = packed["w2"], packed["b2"]
    wh, bh = packed["wh"], packed["bh"]
    A, C = packed["action_dim"], packed["critic_dim"]
    H = w1.shape[1]
    P = wh.shape[1]
    assert w1.shape[0] == S

    tb = _pick_batch_tile(B) if batch_tile is None else batch_tile
    tb = max(8, (tb // 8) * 8)
    grid = (pl.cdiv(B, tb),)

    # Scoped VMEM budget: single-buffered resident weights + double-buffered
    # streamed x/out tiles + live f32 intermediates + slack.
    w_bytes = (w1.size + w2.size + wh.size) * jnp.dtype(w1.dtype).itemsize
    b_bytes = (b1.size + b2.size + bh.size) * 4
    io_bytes = (2 * tb * S * jnp.dtype(state.dtype).itemsize
                + 2 * tb * P * jnp.dtype(out_dtype).itemsize)
    live_bytes = 2 * tb * H * 4 + tb * P * 4
    vmem_limit = int(w_bytes + b_bytes + io_bytes + live_bytes) + (8 << 20)
    vmem_limit = min(max(vmem_limit, 16 << 20), 128 << 20)

    kernel = functools.partial(_ac_kernel, action_dim=A)
    resident = dict(pipeline_mode=pl.Buffered(1))  # constant blocks: no double-buffer

    out = pl.pallas_call(
        kernel,
        grid=grid,
        in_specs=[
            pl.BlockSpec((tb, S), lambda i: (i, 0)),              # streamed state tile
            pl.BlockSpec((S, H), lambda i: (0, 0), **resident),   # VMEM-resident weights
            pl.BlockSpec((1, H), lambda i: (0, 0), **resident),
            pl.BlockSpec((H, H), lambda i: (0, 0), **resident),
            pl.BlockSpec((1, H), lambda i: (0, 0), **resident),
            pl.BlockSpec((H, P), lambda i: (0, 0), **resident),   # fused head weight
            pl.BlockSpec((1, P), lambda i: (0, 0), **resident),   # fused head bias
        ],
        out_specs=pl.BlockSpec((tb, P), lambda i: (i, 0)),
        out_shape=jax.ShapeDtypeStruct((B, P), out_dtype),
        compiler_params=pltpu.CompilerParams(
            dimension_semantics=("parallel",),
            vmem_limit_bytes=vmem_limit),
    )(state, w1, b1, w2, b2, wh, bh)

    act = out[:, :A]
    val = out[:, A:A + C]
    return act, val


def init_params(key, state_dim, hidden_size, action_dim, critic_output_size=1):
    """Deterministic init mimicking nn.Linear default U(-1/sqrt(fan_in), 1/sqrt(fan_in)).
    Weights are stored transposed relative to PyTorch ((in, out)) so the kernel
    computes x @ W + b directly on the MXU."""
    ks = jax.random.split(key, 8)

    def lin(kw, kb, fan_in, fan_out):
        bound = 1.0 / jnp.sqrt(jnp.float32(fan_in))
        w = jax.random.uniform(kw, (fan_in, fan_out), jnp.float32, -bound, bound)
        b = jax.random.uniform(kb, (1, fan_out), jnp.float32, -bound, bound)
        return w, b

    w1, b1 = lin(ks[0], ks[1], state_dim, hidden_size)
    w2, b2 = lin(ks[2], ks[3], hidden_size, hidden_size)
    wa, ba = lin(ks[4], ks[5], hidden_size, action_dim)
    wc, bc = lin(ks[6], ks[7], hidden_size, critic_output_size)
    return {"w1": w1, "b1": b1, "w2": w2, "b2": b2,
            "wa": wa, "ba": ba, "wc": wc, "bc": bc}


def _reference_forward(state, p):
    h1 = jnp.maximum(state @ p["w1"] + p["b1"], 0.0)
    h2 = jnp.maximum(h1 @ p["w2"] + p["b2"], 0.0)
    logits = h2 @ p["wa"] + p["ba"]
    act = jax.nn.log_softmax(logits, axis=-1)
    val = h2 @ p["wc"] + p["bc"]
    return act, val


if __name__ == "__main__":
    batch = 2
    state_dim = 16
    hidden_size = 32
    action_dim = 4
    critic_output_size = 1

    key = jax.random.PRNGKey(0)
    k_state, k_params = jax.random.split(key)

    state = jax.random.normal(k_state, (batch, state_dim), jnp.float32)
    params = init_params(k_params, state_dim, hidden_size, action_dim,
                         critic_output_size)
    act_ref, val_ref = _reference_forward(state, params)

    # f32 matmul path: bit-parity with the reference at toy shapes.
    packed_f32 = pack_params(params, compute_dtype=jnp.float32)
    act, val = actor_critic_forward(state, packed_f32)
    jax.block_until_ready((act, val))
    assert act.shape == (batch, action_dim) and val.shape == (batch, critic_output_size)
    assert jnp.allclose(act, act_ref, atol=1e-5, rtol=1e-5)
    assert jnp.allclose(val, val_ref, atol=1e-5, rtol=1e-5)

    # bf16 matmul-input path (production default): looser tolerance vs f32 ref.
    packed_bf16 = pack_params(params)  # compute_dtype=jnp.bfloat16
    act_b, val_b = actor_critic_forward(state, packed_bf16, out_dtype=jnp.bfloat16)
    jax.block_until_ready((act_b, val_b))
    assert act_b.shape == (batch, action_dim) and val_b.shape == (batch, critic_output_size)
    assert jnp.allclose(act_b.astype(jnp.float32), act_ref, atol=1e-1, rtol=1e-1)
    assert jnp.allclose(val_b.astype(jnp.float32), val_ref, atol=1e-1, rtol=1e-1)

    print("KERNEL_OK")
</pallas_src>

<mosaic_0001>
module attributes {stable_mosaic.version = 11 : i64} {
  func.func @_ac_kernel(%arg0: i32, %arg1: memref<8x16xf32, #tpu.memory_space<vmem>>, %arg2: memref<16x32xf32, #tpu.memory_space<vmem>>, %arg3: memref<1x32xf32, #tpu.memory_space<vmem>>, %arg4: memref<32x32xf32, #tpu.memory_space<vmem>>, %arg5: memref<1x32xf32, #tpu.memory_space<vmem>>, %arg6: memref<32x128xf32, #tpu.memory_space<vmem>>, %arg7: memref<1x128xf32, #tpu.memory_space<vmem>>, %arg8: memref<8x128xf32, #tpu.memory_space<vmem>>) attributes {dimension_semantics = [#tpu.dimension_semantics<parallel>], iteration_bounds = array<i64: 1>, scalar_prefetch = 0 : i64, scratch_operands = 0 : i64, tpu.core_type = #tpu.core_type<tc>, window_params = [{transform_indices = @transform_0, window_bounds = array<i64: 8, 16>}, {pipeline_mode = #tpu.pipeline_mode<synchronous>, transform_indices = @transform_1, window_bounds = array<i64: 16, 32>}, {pipeline_mode = #tpu.pipeline_mode<synchronous>, transform_indices = @transform_2, window_bounds = array<i64: 1, 32>}, {pipeline_mode = #tpu.pipeline_mode<synchronous>, transform_indices = @transform_3, window_bounds = array<i64: 32, 32>}, {pipeline_mode = #tpu.pipeline_mode<synchronous>, transform_indices = @transform_4, window_bounds = array<i64: 1, 32>}, {pipeline_mode = #tpu.pipeline_mode<synchronous>, transform_indices = @transform_5, window_bounds = array<i64: 32, 128>}, {pipeline_mode = #tpu.pipeline_mode<synchronous>, transform_indices = @transform_6, window_bounds = array<i64: 1, 128>}, {transform_indices = @transform_7, window_bounds = array<i64: 8, 128>}]} {
    %c0 = arith.constant 0 : index
    %c0_0 = arith.constant 0 : index
    %0 = vector.load %arg1[%c0, %c0_0] : memref<8x16xf32, #tpu.memory_space<vmem>>, vector<8x16xf32>
    %c0_1 = arith.constant 0 : index
    %c0_2 = arith.constant 0 : index
    %1 = vector.load %arg2[%c0_1, %c0_2] : memref<16x32xf32, #tpu.memory_space<vmem>>, vector<16x32xf32>
    %cst = arith.constant dense<0.000000e+00> : vector<8x32xf32>
    %2 = tpu.matmul %0, %1, %cst {dimension_numbers = #tpu.dot_dimension_numbers<[1], [0], [0], [1], [0, 0, 1, 1], [], []>} : vector<8x16xf32>, vector<16x32xf32>, vector<8x32xf32> -> vector<8x32xf32>
    %c0_3 = arith.constant 0 : index
    %c0_4 = arith.constant 0 : index
    %3 = vector.load %arg3[%c0_3, %c0_4] : memref<1x32xf32, #tpu.memory_space<vmem>>, vector<1x32xf32>
    %4 = vector.broadcast %3 : vector<1x32xf32> to vector<8x32xf32>
    %5 = arith.addf %2, %4 : vector<8x32xf32>
    %cst_5 = arith.constant 0.000000e+00 : f32
    %6 = vector.broadcast %cst_5 : f32 to vector<8x32xf32>
    %7 = arith.maximumf %5, %6 : vector<8x32xf32>
    %c0_6 = arith.constant 0 : index
    %c0_7 = arith.constant 0 : index
    %8 = vector.load %arg4[%c0_6, %c0_7] : memref<32x32xf32, #tpu.memory_space<vmem>>, vector<32x32xf32>
    %cst_8 = arith.constant dense<0.000000e+00> : vector<8x32xf32>
    %9 = tpu.matmul %7, %8, %cst_8 {dimension_numbers = #tpu.dot_dimension_numbers<[1], [0], [0], [1], [0, 0, 1, 1], [], []>} : vector<8x32xf32>, vector<32x32xf32>, vector<8x32xf32> -> vector<8x32xf32>
    %c0_9 = arith.constant 0 : index
    %c0_10 = arith.constant 0 : index
    %10 = vector.load %arg5[%c0_9, %c0_10] : memref<1x32xf32, #tpu.memory_space<vmem>>, vector<1x32xf32>
    %11 = vector.broadcast %10 : vector<1x32xf32> to vector<8x32xf32>
    %12 = arith.addf %9, %11 : vector<8x32xf32>
    %cst_11 = arith.constant 0.000000e+00 : f32
    %13 = vector.broadcast %cst_11 : f32 to vector<8x32xf32>
    %14 = arith.maximumf %12, %13 : vector<8x32xf32>
    %c0_12 = arith.constant 0 : index
    %c0_13 = arith.constant 0 : index
    %15 = vector.load %arg6[%c0_12, %c0_13] : memref<32x128xf32, #tpu.memory_space<vmem>>, vector<32x128xf32>
    %cst_14 = arith.constant dense<0.000000e+00> : vector<8x128xf32>
    %16 = tpu.matmul %14, %15, %cst_14 {dimension_numbers = #tpu.dot_dimension_numbers<[1], [0], [0], [1], [0, 0, 1, 1], [], []>} : vector<8x32xf32>, vector<32x128xf32>, vector<8x128xf32> -> vector<8x128xf32>
    %c0_15 = arith.constant 0 : index
    %c0_16 = arith.constant 0 : index
    %17 = vector.load %arg7[%c0_15, %c0_16] : memref<1x128xf32, #tpu.memory_space<vmem>>, vector<1x128xf32>
    %18 = vector.broadcast %17 : vector<1x128xf32> to vector<8x128xf32>
    %19 = arith.addf %16, %18 : vector<8x128xf32>
    %20 = tpu.iota {dimensions = array<i32: 1>} : vector<8x128xi32>
    %c4_i32 = arith.constant 4 : i32
    %21 = vector.broadcast %c4_i32 : i32 to vector<8x128xi32>
    %22 = arith.cmpi slt, %20, %21 : vector<8x128xi32>
    %cst_17 = arith.constant 0xFF800000 : f32
    %23 = vector.broadcast %cst_17 : f32 to vector<8x128xf32>
    %24 = arith.select %22, %19, %23 : vector<8x128xi1>, vector<8x128xf32>
    %cst_18 = arith.constant dense<0xFF800000> : vector<8xf32>
    %25 = vector.multi_reduction <maximumf>, %24, %cst_18 [1] : vector<8x128xf32> to vector<8xf32>
    %26 = vector.shape_cast %25 : vector<8xf32> to vector<8x1xf32>
    %27 = vector.broadcast %26 : vector<8x1xf32> to vector<8x128xf32>
    %28 = arith.subf %24, %27 : vector<8x128xf32>
    %29 = math.exp %28 : vector<8x128xf32>
    %cst_19 = arith.constant dense<0.000000e+00> : vector<8xf32>
    %30 = vector.multi_reduction <add>, %29, %cst_19 [1] : vector<8x128xf32> to vector<8xf32>
    %31 = vector.shape_cast %30 : vector<8xf32> to vector<8x1xf32>
    %32 = math.log %31 : vector<8x1xf32>
    %33 = vector.broadcast %32 : vector<8x1xf32> to vector<8x128xf32>
    %34 = arith.subf %28, %33 : vector<8x128xf32>
    %35 = arith.select %22, %34, %19 : vector<8x128xi1>, vector<8x128xf32>
    %c0_20 = arith.constant 0 : index
    %c0_21 = arith.constant 0 : index
    %36 = vector.load %arg8[%c0_20, %c0_21] : memref<8x128xf32, #tpu.memory_space<vmem>>, vector<8x128xf32>
    tpu.vector_store %arg8[%c0_20, %c0_21], %35 {strides = array<i32>} : memref<8x128xf32, #tpu.memory_space<vmem>>, vector<8x128xf32>,
    return
  }
  func.func @transform_0(%arg0: i32) -> (i32, i32) {
    %c0_i32 = arith.constant 0 : i32
    %c0_i32_0 = arith.constant 0 : i32
    return %arg0, %c0_i32 : i32, i32
  }
  func.func @transform_1(%arg0: i32) -> (i32, i32) {
    %c0_i32 = arith.constant 0 : i32
    %c0_i32_0 = arith.constant 0 : i32
    %c0_i32_1 = arith.constant 0 : i32
    return %c0_i32, %c0_i32_0 : i32, i32
  }
  func.func @transform_2(%arg0: i32) -> (i32, i32) {
    %c0_i32 = arith.constant 0 : i32
    %c0_i32_0 = arith.constant 0 : i32
    %c0_i32_1 = arith.constant 0 : i32
    return %c0_i32, %c0_i32_0 : i32, i32
  }
  func.func @transform_3(%arg0: i32) -> (i32, i32) {
    %c0_i32 = arith.constant 0 : i32
    %c0_i32_0 = arith.constant 0 : i32
    %c0_i32_1 = arith.constant 0 : i32
    return %c0_i32, %c0_i32_0 : i32, i32
  }
  func.func @transform_4(%arg0: i32) -> (i32, i32) {
    %c0_i32 = arith.constant 0 : i32
    %c0_i32_0 = arith.constant 0 : i32
    %c0_i32_1 = arith.constant 0 : i32
    return %c0_i32, %c0_i32_0 : i32, i32
  }
  func.func @transform_5(%arg0: i32) -> (i32, i32) {
    %c0_i32 = arith.constant 0 : i32
    %c0_i32_0 = arith.constant 0 : i32
    %c0_i32_1 = arith.constant 0 : i32
    return %c0_i32, %c0_i32_0 : i32, i32
  }
  func.func @transform_6(%arg0: i32) -> (i32, i32) {
    %c0_i32 = arith.constant 0 : i32
    %c0_i32_0 = arith.constant 0 : i32
    %c0_i32_1 = arith.constant 0 : i32
    return %c0_i32, %c0_i32_0 : i32, i32
  }
  func.func @transform_7(%arg0: i32) -> (i32, i32) {
    %c0_i32 = arith.constant 0 : i32
    %c0_i32_0 = arith.constant 0 : i32
    return %arg0, %c0_i32 : i32, i32
  }
}

</mosaic_0001>

<llo_original>
// kernel: tpu_custom_call.1
$region0: #{tpu_custom_call.1}
  #allocation0 [shape = 'u32[]', space=smem, size = 0x4, offset = 0x4, fixed_abs, tag = 'smem constant byte address 0x4 - core index']
  #allocation1 [shape = 'u32[144,128]{1,0:T(1,128)}', space=vmem, size = 0x12000, scoped, tag = 'internal scratch']
  %s0 = inlined_call_operand.hbm [shape: f32[2,16], index: 0, kind: input, shape index: {}]
  %s1 = inlined_call_operand.hbm [shape: f32[16,32], index: 1, kind: input, shape index: {}]
  %s2 = inlined_call_operand.vmem [shape: f32[1,32], index: 2, kind: input, shape index: {}]
  %s3 = inlined_call_operand.hbm [shape: f32[32,32], index: 3, kind: input, shape index: {}]
  %s4 = inlined_call_operand.vmem [shape: f32[1,32], index: 4, kind: input, shape index: {}]
  %s5 = inlined_call_operand.hbm [shape: f32[32,128], index: 5, kind: input, shape index: {}]
  %s6 = inlined_call_operand.vmem [shape: f32[1,128], index: 6, kind: input, shape index: {}]
  %s7 = inlined_call_operand.hbm [shape: f32[2,128], index: 7, kind: output, shape index: {}]
  %s8 = sld [smem:[#allocation0]]
  $region54: #{tpu_custom_call.1} parent=0
    _
  %s10 = ssub.s32 1, %s8
  %s11 = scalar_select 0, %s10, %s8
  $region1: #{tpu_custom_call.1} parent=0
    #allocation2 [shape = 'u8[4096]{0}', space=vmem, size = 0x1000, scoped, tag = 'input window, operand 0, single buffered']
    #allocation3 [shape = 's32[1]{0}', space=sflag, size = 0x4, scoped, tag = 'scoped memory for tpu_custom_call.1']
    #allocation4 [shape = 's32[1]{0}', space=sflag, size = 0x4, scoped, tag = 'scoped memory for tpu_custom_call.1']
    #allocation5 [shape = 'u8[8192]{0}', space=vmem, size = 0x2000, scoped, tag = 'input window, operand 1, single buffered']
    #allocation6 [shape = 's32[1]{0}', space=sflag, size = 0x4, scoped, tag = 'scoped memory for tpu_custom_call.1']
    #allocation7 [shape = 'u8[16384]{0}', space=vmem, size = 0x4000, scoped, tag = 'input window, operand 3, single buffered']
    #allocation8 [shape = 'u8[16384]{0}', space=vmem, size = 0x4000, scoped, tag = 'input window, operand 5, single buffered']
    #allocation9 [shape = 's32[1]{0}', space=sflag, size = 0x4, scoped, tag = 'scoped memory for tpu_custom_call.1']
    #allocation10 [shape = 'u8[4096]{0}', space=vmem, size = 0x1000, scoped, tag = 'output window, operand 0, single buffered']
    %12 = vsyncpa [#allocation3], 0
    %13 = vsyncpa [#allocation6], 0
    %14 = vsyncpa [#allocation9], 0
    %15 = vsyncpa [#allocation4], 0
    // Predicated region
    $region2: #{tpu_custom_call.1} parent=1 // pred_check
      _
    $region3: #{tpu_custom_call.1} parent=1 // pred_check_branch
      %17 = sbr.rel (0) target = $region5
    $region4: #{tpu_custom_call.1} parent=1 // pred_region
      %s19 = ssub.s32 128, 32
      %20 = vsyncadd [#allocation3], %s19
      %s21 = sshll.u32 [#allocation2], 4
      %s22 = int_to_ptr.vmem [resolvable:$true] %s21
      %27 = dma.hbm_to_vmem [thread:$0]  %s0, 32, %s22, [#allocation3], 32, 32, 2
    $region5: #{tpu_custom_call.1} parent=1 // pred_fallthru
      _
    // Predicated region
    $region6: #{tpu_custom_call.1} parent=1 // pred_check
      _
    $region7: #{tpu_custom_call.1} parent=1 // pred_check_branch
      %29 = sbr.rel (0) target = $region9
    $region8: #{tpu_custom_call.1} parent=1 // pred_region
      %s31 = ssub.s32 256, 256
      %32 = vsyncadd [#allocation6], %s31
      %s33 = sshll.u32 [#allocation5], 4
      %s34 = int_to_ptr.vmem [resolvable:$true] %s33
      %39 = dma.hbm_to_vmem [thread:$0]  %s1, 256, %s34, [#allocation6], 128, 128, 8
    $region9: #{tpu_custom_call.1} parent=1 // pred_fallthru
      _
    // Predicated region
    $region10: #{tpu_custom_call.1} parent=1 // pred_check
      _
    $region11: #{tpu_custom_call.1} parent=1 // pred_check_branch
      %41 = sbr.rel (0) target = $region13
    $region12: #{tpu_custom_call.1} parent=1 // pred_region
      _
    $region13: #{tpu_custom_call.1} parent=1 // pred_fallthru
      _
    // Predicated region
    $region14: #{tpu_custom_call.1} parent=1 // pred_check
      _
    $region15: #{tpu_custom_call.1} parent=1 // pred_check_branch
      %43 = sbr.rel (0) target = $region17
    $region16: #{tpu_custom_call.1} parent=1 // pred_region
      %s45 = ssub.s32 512, 512
      %46 = vsyncadd [#allocation6], %s45
      %s47 = sshll.u32 [#allocation7], 4
      %s48 = int_to_ptr.vmem [resolvable:$true] %s47
      %53 = dma.hbm_to_vmem [thread:$0]  %s3, 512, %s48, [#allocation6], 128, 128, 8
    $region17: #{tpu_custom_call.1} parent=1 // pred_fallthru
      _
    // Predicated region
    $region18: #{tpu_custom_call.1} parent=1 // pred_check
      _
    $region19: #{tpu_custom_call.1} parent=1 // pred_check_branch
      %55 = sbr.rel (0) target = $region21
    $region20: #{tpu_custom_call.1} parent=1 // pred_region
      _
    $region21: #{tpu_custom_call.1} parent=1 // pred_fallthru
      _
    // Predicated region
    $region22: #{tpu_custom_call.1} parent=1 // pred_check
      _
    $region23: #{tpu_custom_call.1} parent=1 // pred_check_branch
      %57 = sbr.rel (0) target = $region25
    $region24: #{tpu_custom_call.1} parent=1 // pred_region
      %s59 = ssub.s32 512, 512
      %60 = vsyncadd [#allocation9], %s59
      %s61 = sshll.u32 [#allocation8], 4
      %s62 = int_to_ptr.vmem [resolvable:$true] %s61
      %67 = dma.hbm_to_vmem [thread:$0]  %s5, 512, %s62, [#allocation9], 128, 128, 8
    $region25: #{tpu_custom_call.1} parent=1 // pred_fallthru
      _
    // Predicated region
    $region26: #{tpu_custom_call.1} parent=1 // pred_check
      _
    $region27: #{tpu_custom_call.1} parent=1 // pred_check_branch
      %69 = sbr.rel (0) target = $region29
    $region28: #{tpu_custom_call.1} parent=1 // pred_region
      _
    $region29: #{tpu_custom_call.1} parent=1 // pred_fallthru
      _
    // Predicated region
    $region30: #{tpu_custom_call.1} parent=1 // pred_check
      _
    $region31: #{tpu_custom_call.1} parent=1 // pred_check_branch
      %71 = sbr.rel (0) target = $region33
    $region32: #{tpu_custom_call.1} parent=1 // pred_region
      %72 = dma.done [#allocation3], 128
    $region33: #{tpu_custom_call.1} parent=1 // pred_fallthru
      _
    // Predicated region
    $region34: #{tpu_custom_call.1} parent=1 // pred_check
      _
    $region35: #{tpu_custom_call.1} parent=1 // pred_check_branch
      %74 = sbr.rel (0) target = $region37
    $region36: #{tpu_custom_call.1} parent=1 // pred_region
      %75 = dma.done [#allocation6], 256
    $region37: #{tpu_custom_call.1} parent=1 // pred_fallthru
      _
    // Predicated region
    $region38: #{tpu_custom_call.1} parent=1 // pred_check
      _
    $region39: #{tpu_custom_call.1} parent=1 // pred_check_branch
      %77 = sbr.rel (0) target = $region41
    $region40: #{tpu_custom_call.1} parent=1 // pred_region
      %78 = dma.done [#allocation6], 512
    $region41: #{tpu_custom_call.1} parent=1 // pred_fallthru
      _
    // Predicated region
    $region42: #{tpu_custom_call.1} parent=1 // pred_check
      _
    $region43: #{tpu_custom_call.1} parent=1 // pred_check_branch
      %80 = sbr.rel (0) target = $region45
    $region44: #{tpu_custom_call.1} parent=1 // pred_region
      %81 = dma.done [#allocation9], 512
    $region45: #{tpu_custom_call.1} parent=1 // pred_fallthru
      _
    %v82 = vld [vmem:[#allocation2] sm:$0xff]
    %v83 = vld [vmem:[#allocation5] sm:$0xff]
    %v84 = vld [vmem:[#allocation5 + $0x8] sm:$0xff]
    %v85 = vld [vmem:[%s2] sm:$0x1]
    %v87 = vlaneseq
    %v88 = vshrl.u32 %v87, 7
    %v89 = vsub.s32 0, %v88
    %v90 = vrot.slane %v85, %v89
    %vm92 = vcmask 130048
    %v94 = vsel %vm92, %v82, 0
    %96 = vmatprep.subr.mxu0 0.0
    %97 = vmatpush1.msra.mxu0 %v83
    %98 = vmatprep.subr.mxu0 0.0
    %99 = vmatpush1.msra.mxu0 %v84
    %100 = vmatprep.subr.mxu0 0.0
    %101 = vmatpush1.msra.mxu0 0.0
    %102 = vmatprep.subr.mxu0 0.0
    %103 = vmatpush1.msra.mxu0 0.0
    %104 = vmatprep.subr.mxu0 0.0
    %105 = vmatpush1.msra.mxu0 0.0
    %106 = vmatprep.subr.mxu0 0.0
    %107 = vmatpush1.msra.mxu0 0.0
    %108 = vmatprep.subr.mxu0 0.0
    %109 = vmatpush1.msra.mxu0 0.0
    %110 = vmatprep.subr.mxu0 0.0
    %111 = vmatpush1.msra.mxu0 0.0
    %112 = vmatprep.subr.mxu0 0.0
    %113 = vmatpush1.msra.mxu0 0.0
    %114 = vmatprep.subr.mxu0 0.0
    %115 = vmatpush1.msra.mxu0 0.0
    %116 = vmatprep.subr.mxu0 0.0
    %117 = vmatpush1.msra.mxu0 0.0
    %118 = vmatprep.subr.mxu0 0.0
    %119 = vmatpush1.msra.mxu0 0.0
    %120 = vmatprep.subr.mxu0 0.0
    %121 = vmatpush1.msra.mxu0 0.0
    %122 = vmatprep.subr.mxu0 0.0
    %123 = vmatpush1.msra.mxu0 0.0
    %124 = vmatprep.subr.mxu0 0.0
    %125 = vmatpush1.msra.mxu0 0.0
    %126 = vmatprep.subr.mxu0 0.0
    %127 = vmatpush1.msra.mxu0 0.0
    %128 = vmatprep.subr.mxu0 0.0
    %129 = vmatpush1.msra.mxu0 0.0
    %130 = vmatprep.subr.mxu0 0.0
    %131 = vmatpush1.msra.mxu0 0.0
    %132 = vmatprep.subr.mxu0 0.0
    %133 = vmatpush1.msra.mxu0 0.0
    %134 = vmatprep.subr.mxu0 0.0
    %135 = vmatpush1.msra.mxu0 0.0
    %136 = vmatprep.subr.mxu0 0.0
    %137 = vmatpush1.msra.mxu0 0.0
    %138 = vmatprep.subr.mxu0 0.0
    %139 = vmatpush1.msra.mxu0 0.0
    %140 = vmatprep.subr.mxu0 0.0
    %141 = vmatpush1.msra.mxu0 0.0
    %142 = vmatprep.subr.mxu0 0.0
    %143 = vmatpush1.msra.mxu0 0.0
    %144 = vmatprep.subr.mxu0 0.0
    %145 = vmatpush1.msra.mxu0 0.0
    %146 = vmatprep.subr.mxu0 0.0
    %147 = vmatpush1.msra.mxu0 0.0
    %148 = vmatprep.subr.mxu0 0.0
    %149 = vmatpush1.msra.mxu0 0.0
    %150 = vmatprep.subr.mxu0 0.0
    %151 = vmatpush1.msra.mxu0 0.0
    %152 = vmatprep.subr.mxu0 0.0
    %153 = vmatpush1.msra.mxu0 0.0
    %154 = vmatprep.subr.mxu0 0.0
    %155 = vmatpush1.msra.mxu0 0.0
    %156 = vmatprep.subr.mxu0 0.0
    %157 = vmatpush1.msra.mxu0 0.0
    %158 = vmatprep.subr.mxu0 0.0
    %159 = vmatpush1.msra.mxu0 0.0
    %160 = vmatprep.mubr.f32.mxu0 0.0
    %161 = vmatmul.mubr.f32.gmra.mrb[0].mxu0 %v94
    %v162 = vpop.f32.mrb[0].mxu0
    %v163 = vadd.f32 %v90, %v162
    %v164 = vpop.f32.mrb[0].mxu0
    %165 = vdwg.mxu0
    %v166 = vmax.f32 %v163, 0.0
    %v167 = vld [vmem:[#allocation7] sm:$0xff]
    %v168 = vld [vmem:[#allocation7 + $0x8] sm:$0xff]
    %v169 = vld [vmem:[#allocation7 + $0x10] sm:$0xff]
    %v170 = vld [vmem:[#allocation7 + $0x18] sm:$0xff]
    %v171 = vld [vmem:[%s4] sm:$0x1]
    %v173 = vlaneseq
    %v174 = vshrl.u32 %v173, 7
    %v175 = vsub.s32 0, %v174
    %v176 = vrot.slane %v171, %v175
    %vm178 = vcmask 261120
    %v180 = vsel %vm178, %v166, 0
    %182 = vmatprep.subr.mxu0 0.0
    %183 = vmatpush1.msra.mxu0 %v167
    %184 = vmatprep.subr.mxu0 0.0
    %185 = vmatpush1.msra.mxu0 %v168
    %186 = vmatprep.subr.mxu0 0.0
    %187 = vmatpush1.msra.mxu0 %v169
    %188 = vmatprep.subr.mxu0 0.0
    %189 = vmatpush1.msra.mxu0 %v170
    %190 = vmatprep.subr.mxu0 0.0
    %191 = vmatpush1.msra.mxu0 0.0
    %192 = vmatprep.subr.mxu0 0.0
    %193 = vmatpush1.msra.mxu0 0.0
    %194 = vmatprep.subr.mxu0 0.0
    %195 = vmatpush1.msra.mxu0 0.0
    %196 = vmatprep.subr.mxu0 0.0
    %197 = vmatpush1.msra.mxu0 0.0
    %198 = vmatprep.subr.mxu0 0.0
    %199 = vmatpush1.msra.mxu0 0.0
    %200 = vmatprep.subr.mxu0 0.0
    %201 = vmatpush1.msra.mxu0 0.0
    %202 = vmatprep.subr.mxu0 0.0
    %203 = vmatpush1.msra.mxu0 0.0
    %204 = vmatprep.subr.mxu0 0.0
    %205 = vmatpush1.msra.mxu0 0.0
    %206 = vmatprep.subr.mxu0 0.0
    %207 = vmatpush1.msra.mxu0 0.0
    %208 = vmatprep.subr.mxu0 0.0
    %209 = vmatpush1.msra.mxu0 0.0
    %210 = vmatprep.subr.mxu0 0.0
    %211 = vmatpush1.msra.mxu0 0.0
    %212 = vmatprep.subr.mxu0 0.0
    %213 = vmatpush1.msra.mxu0 0.0
    %214 = vmatprep.subr.mxu0 0.0
    %215 = vmatpush1.msra.mxu0 0.0
    %216 = vmatprep.subr.mxu0 0.0
    %217 = vmatpush1.msra.mxu0 0.0
    %218 = vmatprep.subr.mxu0 0.0
    %219 = vmatpush1.msra.mxu0 0.0
    %220 = vmatprep.subr.mxu0 0.0
    %221 = vmatpush1.msra.mxu0 0.0
    %222 = vmatprep.subr.mxu0 0.0
    %223 = vmatpush1.msra.mxu0 0.0
    %224 = vmatprep.subr.mxu0 0.0
    %225 = vmatpush1.msra.mxu0 0.0
    %226 = vmatprep.subr.mxu0 0.0
    %227 = vmatpush1.msra.mxu0 0.0
    %228 = vmatprep.subr.mxu0 0.0
    %229 = vmatpush1.msra.mxu0 0.0
    %230 = vmatprep.subr.mxu0 0.0
    %231 = vmatpush1.msra.mxu0 0.0
    %232 = vmatprep.subr.mxu0 0.0
    %233 = vmatpush1.msra.mxu0 0.0
    %234 = vmatprep.subr.mxu0 0.0
    %235 = vmatpush1.msra.mxu0 0.0
    %236 = vmatprep.subr.mxu0 0.0
    %237 = vmatpush1.msra.mxu0 0.0
    %238 = vmatprep.subr.mxu0 0.0
    %239 = vmatpush1.msra.mxu0 0.0
    %240 = vmatprep.subr.mxu0 0.0
    %241 = vmatpush1.msra.mxu0 0.0
    %242 = vmatprep.subr.mxu0 0.0
    %243 = vmatpush1.msra.mxu0 0.0
    %244 = vmatprep.subr.mxu0 0.0
    %245 = vmatpush1.msra.mxu0 0.0
    %246 = vmatprep.mubr.f32.mxu0 0.0
    %247 = vmatmul.mubr.f32.gmra.mrb[0].mxu0 %v180
    %v248 = vpop.f32.mrb[0].mxu0
    %v249 = vadd.f32 %v176, %v248
    %v250 = vpop.f32.mrb[0].mxu0
    %251 = vdwg.mxu0
    %v252 = vmax.f32 %v249, 0.0
    %v253 = vld [vmem:[#allocation8] sm:$0xff]
    %v254 = vld [vmem:[#allocation8 + $0x8] sm:$0xff]
    %v255 = vld [vmem:[#allocation8 + $0x10] sm:$0xff]
    %v256 = vld [vmem:[#allocation8 + $0x18] sm:$0xff]
    %v257 = vld [vmem:[%s6] sm:$0x1]
    %v259 = vlaneseq
    %v260 = vshrl.u32 %v259, 7
    %v261 = vsub.s32 0, %v260
    %v262 = vrot.slane %v257, %v261
    %v265 = vsel %vm178, %v252, 0
    %267 = vmatprep.subr.mxu0 0.0
    %268 = vmatpush1.msra.mxu0 %v253
    %269 = vmatprep.subr.mxu0 0.0
    %270 = vmatpush1.msra.mxu0 %v254
    %271 = vmatprep.subr.mxu0 0.0
    %272 = vmatpush1.msra.mxu0 %v255
    %273 = vmatprep.subr.mxu0 0.0
    %274 = vmatpush1.msra.mxu0 %v256
    %275 = vmatprep.subr.mxu0 0.0
    %276 = vmatpush1.msra.mxu0 0.0
    %277 = vmatprep.subr.mxu0 0.0
    %278 = vmatpush1.msra.mxu0 0.0
    %279 = vmatprep.subr.mxu0 0.0
    %280 = vmatpush1.msra.mxu0 0.0
    %281 = vmatprep.subr.mxu0 0.0
    %282 = vmatpush1.msra.mxu0 0.0
    %283 = vmatprep.subr.mxu0 0.0
    %284 = vmatpush1.msra.mxu0 0.0
    %285 = vmatprep.subr.mxu0 0.0
    %286 = vmatpush1.msra.mxu0 0.0
    %287 = vmatprep.subr.mxu0 0.0
    %288 = vmatpush1.msra.mxu0 0.0
    %289 = vmatprep.subr.mxu0 0.0
    %290 = vmatpush1.msra.mxu0 0.0
    %291 = vmatprep.subr.mxu0 0.0
    %292 = vmatpush1.msra.mxu0 0.0
    %293 = vmatprep.subr.mxu0 0.0
    %294 = vmatpush1.msra.mxu0 0.0
    %295 = vmatprep.subr.mxu0 0.0
    %296 = vmatpush1.msra.mxu0 0.0
    %297 = vmatprep.subr.mxu0 0.0
    %298 = vmatpush1.msra.mxu0 0.0
    %299 = vmatprep.subr.mxu0 0.0
    %300 = vmatpush1.msra.mxu0 0.0
    %301 = vmatprep.subr.mxu0 0.0
    %302 = vmatpush1.msra.mxu0 0.0
    %303 = vmatprep.subr.mxu0 0.0
    %304 = vmatpush1.msra.mxu0 0.0
    %305 = vmatprep.subr.mxu0 0.0
    %306 = vmatpush1.msra.mxu0 0.0
    %307 = vmatprep.subr.mxu0 0.0
    %308 = vmatpush1.msra.mxu0 0.0
    %309 = vmatprep.subr.mxu0 0.0
    %310 = vmatpush1.msra.mxu0 0.0
    %311 = vmatprep.subr.mxu0 0.0
    %312 = vmatpush1.msra.mxu0 0.0
    %313 = vmatprep.subr.mxu0 0.0
    %314 = vmatpush1.msra.mxu0 0.0
    %315 = vmatprep.subr.mxu0 0.0
    %316 = vmatpush1.msra.mxu0 0.0
    %317 = vmatprep.subr.mxu0 0.0
    %318 = vmatpush1.msra.mxu0 0.0
    %319 = vmatprep.subr.mxu0 0.0
    %320 = vmatpush1.msra.mxu0 0.0
    %321 = vmatprep.subr.mxu0 0.0
    %322 = vmatpush1.msra.mxu0 0.0
    %323 = vmatprep.subr.mxu0 0.0
    %324 = vmatpush1.msra.mxu0 0.0
    %325 = vmatprep.subr.mxu0 0.0
    %326 = vmatpush1.msra.mxu0 0.0
    %327 = vmatprep.subr.mxu0 0.0
    %328 = vmatpush1.msra.mxu0 0.0
    %329 = vmatprep.subr.mxu0 0.0
    %330 = vmatpush1.msra.mxu0 0.0
    %331 = vmatprep.mubr.f32.mxu0 0.0
    %332 = vmatmul.mubr.f32.gmra.mrb[0].mxu0 %v265
    %v333 = vpop.f32.mrb[0].mxu0
    %v334 = vadd.f32 %v262, %v333
    %v335 = vpop.f32.mrb[0].mxu0
    %336 = vdwg.mxu0
    %v337 = vlaneseq
    %v338 = vand.u32 %v337, 127
    %vm339 = vcmp.lt.s32.totalorder %v338, 4
    %v340 = vsel %vm339, %v334, -inf
    %341 = vmax.xlane.f32.xlu0 %v340
    %v342 = vpop.xlane.xlu0 %341
    %v343 = vsub.f32 %v340, %v342
    %v344 = vmul.f32 %v343, 1.442695
    %v345 = vpow.pop %v344
    %346 = vadd.xlane.f32.xlu0 %v345
    %v347 = vpop.xlane.xlu0 %346
    %v348 = vlog2.pop %v347
    %v349 = vmul.f32 %v348, 0.6931472
    %v350 = vsub.f32 %v343, %v349
    %v351 = vsel %vm339, %v350, %v334
    %352 = vst [vmem:[#allocation10] sm:$0xff] %v351
    // Predicated region
    $region46: #{tpu_custom_call.1} parent=1 // pred_check
      _
    $region47: #{tpu_custom_call.1} parent=1 // pred_check_branch
      %354 = sbr.rel (0) target = $region49
    $region48: #{tpu_custom_call.1} parent=1 // pred_region
      %s356 = ssub.s32 128, 32
      %357 = vsyncadd [#allocation4], %s356
      %s358 = sshll.u32 [#allocation10], 4
      %s359 = int_to_ptr.vmem [resolvable:$true] %s358
      %364 = dma.vmem_to_hbm [thread:$0]  %s359, 32, %s7, [#allocation4], 32, 32, 2
    $region49: #{tpu_custom_call.1} parent=1 // pred_fallthru
      _
    // Predicated region
    $region50: #{tpu_custom_call.1} parent=1 // pred_check
      _
    $region51: #{tpu_custom_call.1} parent=1 // pred_check_branch
      %366 = sbr.rel (0) target = $region53
    $region52: #{tpu_custom_call.1} parent=1 // pred_region
      %367 = dma.done [#allocation4], 128
    $region53: #{tpu_custom_call.1} parent=1 // pred_fallthru
      _
    %368 = vsyncpa [#allocation3], 1
    %369 = vsyncpa [#allocation6], 1
    %370 = vsyncpa [#allocation9], 1
    %371 = vsyncpa [#allocation4], 1

</llo_original>
